<compile_context>
chip_gen: v6e
topology: v6e:2x2x1
jax: 0.10.0
libtpu: 0.0.40
codegen_flags: <defaults>
</compile_context>

<pallas_src>
import jax
import jax.numpy as jnp
from jax.experimental import pallas as pl
from jax.experimental.pallas import tpu as pltpu


def _house_mlp_kernel(x_ref, w1_ref, b1_ref, w2_ref, b2_ref, w3_ref, b3_ref,
                      o_ref):
    # x_ref: (TB, F) f32 in natural row-major layout (batch on sublanes).
    # w*_ref: torch-style (out_features, in_features) f32; b*_ref: (out, 1) f32.
    # All matmul results keep batch on the 128-lane axis: (out, TB).
    xb = x_ref[...].astype(jnp.bfloat16)                      # (TB, F) bf16
    w1 = w1_ref[...].astype(jnp.bfloat16)                     # (H1, F)

    # dense1: contract the feature axis of BOTH operands ("NT" matmul), so the
    # (TB,F) -> (F,TB) relayout is folded into the MXU feed instead of being a
    # separate wrapper pass; result is (H1, TB) with batch lane-dense.
    h1 = jax.lax.dot_general(w1, xb, (((1,), (1,)), ((), ())),
                             preferred_element_type=jnp.float32)  # (H1, TB)
    h1 = jnp.maximum(h1 + b1_ref[...], 0.0)                   # f32 epilogue

    # dense2 + relu
    h2 = jnp.dot(w2_ref[...].astype(jnp.bfloat16), h1.astype(jnp.bfloat16),
                 preferred_element_type=jnp.float32)          # (H2, TB)
    h2 = jnp.maximum(h2 + b2_ref[...], 0.0)

    # dropout(p=0.2) in eval mode == identity.

    # dense3
    y = jnp.dot(w3_ref[...].astype(jnp.bfloat16), h2.astype(jnp.bfloat16),
                preferred_element_type=jnp.float32)           # (OUT, TB)
    o_ref[...] = (y + b3_ref[...]).astype(o_ref.dtype)


def _round_up(n, m):
    return ((n + m - 1) // m) * m


def _pick_tile(batch, tb_max):
    """Adaptive batch tile: big enough to amortize per-step pipeline overhead,
    >=2 tiles when the batch allows (v7x megacore), capped for VMEM."""
    if batch <= 512:
        return 512                      # one (possibly partial) tile
    return min(tb_max, _round_up(pl.cdiv(batch, 2), 512))


def house_model_forward(x, params, *, tb_max=8192):
    """x: (B, feature) float32.  params: torch-layout weights/biases.

    Returns (B, out_dim) float32.  `tb_max` can be swept upward (16K-32K) if
    the VMEM limit below is raised; 8192 keeps the double-buffered footprint
    comfortably inside 32 MiB on every TPU generation.
    """
    w1, b1, w2, b2, w3, b3 = (params["w1"], params["b1"], params["w2"],
                              params["b2"], params["w3"], params["b3"])
    B, feature = x.shape
    h1_dim, h2_dim, out_dim = w1.shape[0], w2.shape[0], w3.shape[0]

    tb = _pick_tile(B, tb_max)
    n_tiles = pl.cdiv(B, tb)

    flops = 2 * B * (feature * h1_dim + h1_dim * h2_dim + h2_dim * out_dim)
    bytes_accessed = (4 * B * feature + 4 * B * out_dim
                      + 4 * int(w1.size + b1.size + w2.size + b2.size
                                + w3.size + b3.size))

    out_t = pl.pallas_call(
        _house_mlp_kernel,
        out_shape=jax.ShapeDtypeStruct((out_dim, B), jnp.float32),
        grid_spec=pltpu.PrefetchScalarGridSpec(
            num_scalar_prefetch=0,
            grid=(n_tiles,),
            in_specs=[
                # streamed activations: one (tb, feature) tile per grid step,
                # read straight from x's natural layout (no wrapper relayout).
                pl.BlockSpec((tb, feature), lambda i: (i, 0)),
                # weights/biases: full arrays, constant block index ->
                # VMEM-resident across the whole batch grid (DMA'd once).
                pl.BlockSpec((h1_dim, feature), lambda i: (0, 0)),
                pl.BlockSpec((h1_dim, 1), lambda i: (0, 0)),
                pl.BlockSpec((h2_dim, h1_dim), lambda i: (0, 0)),
                pl.BlockSpec((h2_dim, 1), lambda i: (0, 0)),
                pl.BlockSpec((out_dim, h2_dim), lambda i: (0, 0)),
                pl.BlockSpec((out_dim, 1), lambda i: (0, 0)),
            ],
            # lane-dense output store: (out_dim, tb) columns per grid step.
            out_specs=pl.BlockSpec((out_dim, tb), lambda i: (0, i)),
        ),
        compiler_params=pltpu.CompilerParams(
            dimension_semantics=("parallel",),
            vmem_limit_bytes=32 << 20,
        ),
        cost_estimate=pl.CostEstimate(flops=int(flops), transcendentals=0,
                                      bytes_accessed=int(bytes_accessed)),
    )(x, w1, b1, w2, b2, w3, b3)

    return jnp.transpose(out_t)          # (B, out_dim); trivial for out_dim=1


def init_params(feature, output, key):
    """Deterministic init mimicking torch.nn.Linear defaults
    (uniform(-1/sqrt(fan_in), 1/sqrt(fan_in))). Weights stored torch-style as
    (out_features, in_features); biases as (out_features, 1)."""
    keys = jax.random.split(key, 6)

    def linear(kw, kb, fan_in, fan_out):
        bound = 1.0 / jnp.sqrt(jnp.float32(fan_in))
        w = jax.random.uniform(kw, (fan_out, fan_in), jnp.float32,
                               minval=-bound, maxval=bound)
        b = jax.random.uniform(kb, (fan_out, 1), jnp.float32,
                               minval=-bound, maxval=bound)
        return w, b

    w1, b1 = linear(keys[0], keys[1], feature, 10)
    w2, b2 = linear(keys[2], keys[3], 10, 15)
    w3, b3 = linear(keys[4], keys[5], 15, output)
    return dict(w1=w1, b1=b1, w2=w2, b2=b2, w3=w3, b3=b3)


def _reference_forward(x, p):
    """Pure-JAX reference with the same bf16 matmul inputs / f32 accumulation.
    NOTE: bf16 streaming diverges from a pure-f32 PyTorch forward by ~1e-2
    relative; keep weights/x in f32 inside the kernel if exact f32 parity is
    required."""
    xb = x.astype(jnp.bfloat16)
    w1 = p["w1"].astype(jnp.bfloat16)
    w2 = p["w2"].astype(jnp.bfloat16)
    w3 = p["w3"].astype(jnp.bfloat16)
    h1 = jnp.dot(xb, w1.T, preferred_element_type=jnp.float32) + p["b1"].T
    h1 = jnp.maximum(h1, 0.0)
    h2 = jnp.dot(h1.astype(jnp.bfloat16), w2.T,
                 preferred_element_type=jnp.float32) + p["b2"].T
    h2 = jnp.maximum(h2, 0.0)
    return jnp.dot(h2.astype(jnp.bfloat16), w3.T,
                   preferred_element_type=jnp.float32) + p["b3"].T


if __name__ == "__main__":
    # batch=1000 exercises: adaptive tile (tb=512 -> 2 tiles), the partial
    # last tile (488 valid rows), and the multi-tile "parallel" grid axis.
    feature, output, batch = 13, 1, 1000
    key = jax.random.PRNGKey(0)
    k_x, k_p = jax.random.split(key)

    x = jax.random.normal(k_x, (batch, feature), dtype=jnp.float32)
    params = init_params(feature, output, k_p)

    y = house_model_forward(x, params)
    y = jax.block_until_ready(y)

    y_ref = _reference_forward(x, params)
    assert y.shape == (batch, output)
    assert bool(jnp.allclose(y, y_ref, atol=2e-3, rtol=2e-3)), (
        float(jnp.max(jnp.abs(y - y_ref))))

    print("KERNEL_OK")
</pallas_src>

<mosaic_0001>
module attributes {stable_mosaic.version = 11 : i64} {
  func.func @_house_mlp_kernel(%arg0: i32, %arg1: memref<512x13xf32, #tpu.memory_space<vmem>>, %arg2: memref<10x13xf32, #tpu.memory_space<vmem>>, %arg3: memref<10x1xf32, #tpu.memory_space<vmem>>, %arg4: memref<15x10xf32, #tpu.memory_space<vmem>>, %arg5: memref<15x1xf32, #tpu.memory_space<vmem>>, %arg6: memref<1x15xf32, #tpu.memory_space<vmem>>, %arg7: memref<1x1xf32, #tpu.memory_space<vmem>>, %arg8: memref<1x512xf32, #tpu.memory_space<vmem>>) attributes {dimension_semantics = [#tpu.dimension_semantics<parallel>], iteration_bounds = array<i64: 2>, scalar_prefetch = 0 : i64, scratch_operands = 0 : i64, tpu.core_type = #tpu.core_type<tc>, window_params = [{transform_indices = @transform_0, window_bounds = array<i64: 512, 13>}, {pipeline_mode = #tpu.pipeline_mode<synchronous>, transform_indices = @transform_1, window_bounds = array<i64: 10, 13>}, {pipeline_mode = #tpu.pipeline_mode<synchronous>, transform_indices = @transform_2, window_bounds = array<i64: 10, 1>}, {pipeline_mode = #tpu.pipeline_mode<synchronous>, transform_indices = @transform_3, window_bounds = array<i64: 15, 10>}, {pipeline_mode = #tpu.pipeline_mode<synchronous>, transform_indices = @transform_4, window_bounds = array<i64: 15, 1>}, {pipeline_mode = #tpu.pipeline_mode<synchronous>, transform_indices = @transform_5, window_bounds = array<i64: 1, 15>}, {pipeline_mode = #tpu.pipeline_mode<synchronous>, transform_indices = @transform_6, window_bounds = array<i64: 1, 1>}, {transform_indices = @transform_7, window_bounds = array<i64: 1, 512>}]} {
    %c0 = arith.constant 0 : index
    %c0_0 = arith.constant 0 : index
    %0 = vector.load %arg1[%c0, %c0_0] : memref<512x13xf32, #tpu.memory_space<vmem>>, vector<512x13xf32>
    %1 = arith.truncf %0 : vector<512x13xf32> to vector<512x13xbf16>
    %c0_1 = arith.constant 0 : index
    %c0_2 = arith.constant 0 : index
    %2 = vector.load %arg2[%c0_1, %c0_2] : memref<10x13xf32, #tpu.memory_space<vmem>>, vector<10x13xf32>
    %3 = arith.truncf %2 : vector<10x13xf32> to vector<10x13xbf16>
    %cst = arith.constant dense<0.000000e+00> : vector<10x512xf32>
    %4 = tpu.matmul %3, %1, %cst {dimension_numbers = #tpu.dot_dimension_numbers<[1], [1], [0], [0], [0, 0, 1, 0], [], []>} : vector<10x13xbf16>, vector<512x13xbf16>, vector<10x512xf32> -> vector<10x512xf32>
    %c0_3 = arith.constant 0 : index
    %c0_4 = arith.constant 0 : index
    %5 = vector.load %arg3[%c0_3, %c0_4] : memref<10x1xf32, #tpu.memory_space<vmem>>, vector<10x1xf32>
    %6 = vector.broadcast %5 : vector<10x1xf32> to vector<10x512xf32>
    %7 = arith.addf %4, %6 : vector<10x512xf32>
    %cst_5 = arith.constant 0.000000e+00 : f32
    %8 = vector.broadcast %cst_5 : f32 to vector<10x512xf32>
    %9 = arith.maximumf %7, %8 : vector<10x512xf32>
    %c0_6 = arith.constant 0 : index
    %c0_7 = arith.constant 0 : index
    %10 = vector.load %arg4[%c0_6, %c0_7] : memref<15x10xf32, #tpu.memory_space<vmem>>, vector<15x10xf32>
    %11 = arith.truncf %10 : vector<15x10xf32> to vector<15x10xbf16>
    %12 = arith.truncf %9 : vector<10x512xf32> to vector<10x512xbf16>
    %cst_8 = arith.constant dense<0.000000e+00> : vector<15x512xf32>
    %13 = tpu.matmul %11, %12, %cst_8 {dimension_numbers = #tpu.dot_dimension_numbers<[1], [0], [0], [1], [0, 0, 1, 1], [], []>} : vector<15x10xbf16>, vector<10x512xbf16>, vector<15x512xf32> -> vector<15x512xf32>
    %c0_9 = arith.constant 0 : index
    %c0_10 = arith.constant 0 : index
    %14 = vector.load %arg5[%c0_9, %c0_10] : memref<15x1xf32, #tpu.memory_space<vmem>>, vector<15x1xf32>
    %15 = vector.broadcast %14 : vector<15x1xf32> to vector<15x512xf32>
    %16 = arith.addf %13, %15 : vector<15x512xf32>
    %cst_11 = arith.constant 0.000000e+00 : f32
    %17 = vector.broadcast %cst_11 : f32 to vector<15x512xf32>
    %18 = arith.maximumf %16, %17 : vector<15x512xf32>
    %c0_12 = arith.constant 0 : index
    %c0_13 = arith.constant 0 : index
    %19 = vector.load %arg6[%c0_12, %c0_13] : memref<1x15xf32, #tpu.memory_space<vmem>>, vector<1x15xf32>
    %20 = arith.truncf %19 : vector<1x15xf32> to vector<1x15xbf16>
    %21 = arith.truncf %18 : vector<15x512xf32> to vector<15x512xbf16>
    %cst_14 = arith.constant dense<0.000000e+00> : vector<1x512xf32>
    %22 = tpu.matmul %20, %21, %cst_14 {dimension_numbers = #tpu.dot_dimension_numbers<[1], [0], [0], [1], [0, 0, 1, 1], [], []>} : vector<1x15xbf16>, vector<15x512xbf16>, vector<1x512xf32> -> vector<1x512xf32>
    %c0_15 = arith.constant 0 : index
    %c0_16 = arith.constant 0 : index
    %23 = vector.load %arg7[%c0_15, %c0_16] : memref<1x1xf32, #tpu.memory_space<vmem>>, vector<1x1xf32>
    %24 = vector.broadcast %23 : vector<1x1xf32> to vector<1x512xf32>
    %25 = arith.addf %22, %24 : vector<1x512xf32>
    %c0_17 = arith.constant 0 : index
    %c0_18 = arith.constant 0 : index
    %26 = vector.load %arg8[%c0_17, %c0_18] : memref<1x512xf32, #tpu.memory_space<vmem>>, vector<1x512xf32>
    tpu.vector_store %arg8[%c0_17, %c0_18], %25 {strides = array<i32>} : memref<1x512xf32, #tpu.memory_space<vmem>>, vector<1x512xf32>,
    return
  }
  func.func @transform_0(%arg0: i32) -> (i32, i32) {
    %c0_i32 = arith.constant 0 : i32
    %c0_i32_0 = arith.constant 0 : i32
    return %arg0, %c0_i32 : i32, i32
  }
  func.func @transform_1(%arg0: i32) -> (i32, i32) {
    %c0_i32 = arith.constant 0 : i32
    %c0_i32_0 = arith.constant 0 : i32
    %c0_i32_1 = arith.constant 0 : i32
    return %c0_i32, %c0_i32_0 : i32, i32
  }
  func.func @transform_2(%arg0: i32) -> (i32, i32) {
    %c0_i32 = arith.constant 0 : i32
    %c0_i32_0 = arith.constant 0 : i32
    %c0_i32_1 = arith.constant 0 : i32
    return %c0_i32, %c0_i32_0 : i32, i32
  }
  func.func @transform_3(%arg0: i32) -> (i32, i32) {
    %c0_i32 = arith.constant 0 : i32
    %c0_i32_0 = arith.constant 0 : i32
    %c0_i32_1 = arith.constant 0 : i32
    return %c0_i32, %c0_i32_0 : i32, i32
  }
  func.func @transform_4(%arg0: i32) -> (i32, i32) {
    %c0_i32 = arith.constant 0 : i32
    %c0_i32_0 = arith.constant 0 : i32
    %c0_i32_1 = arith.constant 0 : i32
    return %c0_i32, %c0_i32_0 : i32, i32
  }
  func.func @transform_5(%arg0: i32) -> (i32, i32) {
    %c0_i32 = arith.constant 0 : i32
    %c0_i32_0 = arith.constant 0 : i32
    %c0_i32_1 = arith.constant 0 : i32
    return %c0_i32, %c0_i32_0 : i32, i32
  }
  func.func @transform_6(%arg0: i32) -> (i32, i32) {
    %c0_i32 = arith.constant 0 : i32
    %c0_i32_0 = arith.constant 0 : i32
    %c0_i32_1 = arith.constant 0 : i32
    return %c0_i32, %c0_i32_0 : i32, i32
  }
  func.func @transform_7(%arg0: i32) -> (i32, i32) {
    %c0_i32 = arith.constant 0 : i32
    %c0_i32_0 = arith.constant 0 : i32
    return %c0_i32, %arg0 : i32, i32
  }
}

</mosaic_0001>

<llo_original>
// kernel: tpu_custom_call.1
$region0: #{tpu_custom_call.1}
  #allocation0 [shape = 'u32[]', space=smem, size = 0x4, offset = 0x4, fixed_abs, tag = 'smem constant byte address 0x4 - core index']
  #allocation1 [shape = 'u32[144,128]{1,0:T(1,128)}', space=vmem, size = 0x12000, scoped, tag = 'internal scratch']
  #allocation2 [shape = 'f32[1,1]{1,0:T(1,128)S(1)}', space=vmem, size = 0x200, scoped, tag = 'scoped memory for tpu_custom_call.1']
  %s0 = inlined_call_operand.vmem [shape: f32[1000,13], index: 0, kind: input, shape index: {}]
  %s1 = inlined_call_operand.vmem [shape: f32[10,13], index: 1, kind: input, shape index: {}]
  %s2 = inlined_call_operand.vmem [shape: f32[10,1], index: 2, kind: input, shape index: {}]
  %s3 = inlined_call_operand.vmem [shape: f32[15,10], index: 3, kind: input, shape index: {}]
  %s4 = inlined_call_operand.vmem [shape: f32[15,1], index: 4, kind: input, shape index: {}]
  %s5 = inlined_call_operand.vmem [shape: f32[1,15], index: 5, kind: input, shape index: {}]
  %s6 = inlined_call_operand.<no memory space> [shape: f32[1,1], index: 6, kind: input, shape index: {}]
  %s7 = inlined_call_operand.hbm [shape: f32[1,1000], index: 7, kind: output, shape index: {}]
  %s8 = sld [smem:[#allocation0]]
  $region61: #{tpu_custom_call.1} parent=0
    _
  %s10 = ssub.s32 1, %s8
  %s11 = scalar_select 0, %s10, %s8
  %v12 = vstv %s6
  %13 = vst [vmem:[#allocation2] sm:$0x1] %v12
  $region1: #{tpu_custom_call.1} parent=0
    #allocation3 [shape = 'u8[4096]{0}', space=vmem, size = 0x1000, scoped, tag = 'output window, operand 0']
    #allocation4 [shape = 's32[2]{0}', space=sflag, size = 0x8, scoped, tag = 'scoped memory for tpu_custom_call.1']
    %14 = vsyncpa [#allocation4], 0
    %s15 = scalar_lea.sflag [#allocation4], 1
    %16 = vsyncpa %s15, 0
    loop: start=0, step=1, limit=4
    $region2: #{tpu_custom_call.1} parent=1 // loop_pre_header
      _
    $region3: #{tpu_custom_call.1} parent=1 // loop_header
      %s18 = sphi 0, %s22
      %p19 = scmp.ge.s32.totalorder %s18, 4
      %s28 = sphi 0, %s30
      %s31 = sphi 0, %s28
      %s32 = sphi 0, %s31
      %s48 = sphi 0, %s32
      %s52 = sphi 0, %s52
      %s54 = sphi 0, %s52
      %s55 = sphi 0, %s54
      %s69 = sphi 0, %s55
      %s73 = sphi 0, %s73
      %s75 = sphi 0, %s73
      %s76 = sphi 0, %s75
      %s90 = sphi 0, %s76
      %s94 = sphi 0, %s94
      %s96 = sphi 0, %s94
      %s97 = sphi 0, %s96
      %s111 = sphi 0, %s97
      %s115 = sphi 0, %s115
      %s117 = sphi 0, %s115
      %s118 = sphi 0, %s117
      %s132 = sphi 0, %s118
      %s136 = sphi 0, %s136
      %s138 = sphi 0, %s136
      %s139 = sphi 0, %s138
      %s153 = sphi 0, %s139
      %s157 = sphi 0, %s157
      %s159 = sphi 0, %s157
      %s160 = sphi 0, %s159
      %s174 = sphi 0, %s160
      %s180 = sphi 0, %s182
      %s183 = sphi 0, %s180
      %s184 = sphi 0, %s183
      %s200 = sphi 0, %s184
    $region4: #{tpu_custom_call.1} parent=1 // loop_header_branch
      %21 = sbr.rel (%p19) target = $region8
    $region5: #{tpu_custom_call.1} parent=1 // loop_body
      %s23 = ssub.s32 %s18, 1
      %s24 = ssub.s32 %s18, 2
      %s25 = sadd.s32 %s18, 1
      %s26 = ssub.s32 %s18, %s25
      %p27 = scmp.eq.s32.totalorder %s26, 0
      %s29 = sadd.s32 %s28, 1
      %s30 = scalar_select %p27, %s28, %s29
      %p33 = pneg %p27
      %p34 = scmp.eq.s32.totalorder %s18, 1
      %p35 = por %p33, %p34
      %p36 = scmp.ne.s32.totalorder %s28, %s31
      %p37 = scmp.eq.s32.totalorder %s18, 0
      %p38 = por %p36, %p37
      %p39 = scmp.ne.s32.totalorder %s28, %s31
      %p40 = scmp.eq.s32.totalorder %s23, 1
      %p41 = por %p39, %p40
      %p42 = scmp.ne.s32.totalorder %s31, %s32
      %p43 = scmp.eq.s32.totalorder %s23, 0
      %p44 = por %p42, %p43
      %p45 = scmp.ne.s32.totalorder %s31, %s32
      %p46 = scmp.eq.s32.totalorder %s24, 1
      %p47 = por %p45, %p46
      %p49 = scmp.ne.s32.totalorder %s32, %s48
      %p50 = scmp.eq.s32.totalorder %s24, 0
      %p51 = por %p49, %p50
      %s53 = sadd.s32 %s52, 1
      %p56 = scmp.eq.s32.totalorder %s18, 1
      %p57 = scmp.ne.s32.totalorder %s52, %s54
      %p58 = scmp.eq.s32.totalorder %s18, 0
      %p59 = por %p57, %p58
      %p60 = scmp.ne.s32.totalorder %s52, %s54
      %p61 = scmp.eq.s32.totalorder %s23, 1
      %p62 = por %p60, %p61
      %p63 = scmp.ne.s32.totalorder %s54, %s55
      %p64 = scmp.eq.s32.totalorder %s23, 0
      %p65 = por %p63, %p64
      %p66 = scmp.ne.s32.totalorder %s54, %s55
      %p67 = scmp.eq.s32.totalorder %s24, 1
      %p68 = por %p66, %p67
      %p70 = scmp.ne.s32.totalorder %s55, %s69
      %p71 = scmp.eq.s32.totalorder %s24, 0
      %p72 = por %p70, %p71
      %s74 = sadd.s32 %s73, 1
      %p77 = scmp.eq.s32.totalorder %s18, 1
      %p78 = scmp.ne.s32.totalorder %s73, %s75
      %p79 = scmp.eq.s32.totalorder %s18, 0
      %p80 = por %p78, %p79
      %p81 = scmp.ne.s32.totalorder %s73, %s75
      %p82 = scmp.eq.s32.totalorder %s23, 1
      %p83 = por %p81, %p82
      %p84 = scmp.ne.s32.totalorder %s75, %s76
      %p85 = scmp.eq.s32.totalorder %s23, 0
      %p86 = por %p84, %p85
      %p87 = scmp.ne.s32.totalorder %s75, %s76
      %p88 = scmp.eq.s32.totalorder %s24, 1
      %p89 = por %p87, %p88
      %p91 = scmp.ne.s32.totalorder %s76, %s90
      %p92 = scmp.eq.s32.totalorder %s24, 0
      %p93 = por %p91, %p92
      %s95 = sadd.s32 %s94, 1
      %p98 = scmp.eq.s32.totalorder %s18, 1
      %p99 = scmp.ne.s32.totalorder %s94, %s96
      %p100 = scmp.eq.s32.totalorder %s18, 0
      %p101 = por %p99, %p100
      %p102 = scmp.ne.s32.totalorder %s94, %s96
      %p103 = scmp.eq.s32.totalorder %s23, 1
      %p104 = por %p102, %p103
      %p105 = scmp.ne.s32.totalorder %s96, %s97
      %p106 = scmp.eq.s32.totalorder %s23, 0
      %p107 = por %p105, %p106
      %p108 = scmp.ne.s32.totalorder %s96, %s97
      %p109 = scmp.eq.s32.totalorder %s24, 1
      %p110 = por %p108, %p109
      %p112 = scmp.ne.s32.totalorder %s97, %s111
      %p113 = scmp.eq.s32.totalorder %s24, 0
      %p114 = por %p112, %p113
      %s116 = sadd.s32 %s115, 1
      %p119 = scmp.eq.s32.totalorder %s18, 1
      %p120 = scmp.ne.s32.totalorder %s115, %s117
      %p121 = scmp.eq.s32.totalorder %s18, 0
      %p122 = por %p120, %p121
      %p123 = scmp.ne.s32.totalorder %s115, %s117
      %p124 = scmp.eq.s32.totalorder %s23, 1
      %p125 = por %p123, %p124
      %p126 = scmp.ne.s32.totalorder %s117, %s118
      %p127 = scmp.eq.s32.totalorder %s23, 0
      %p128 = por %p126, %p127
      %p129 = scmp.ne.s32.totalorder %s117, %s118
      %p130 = scmp.eq.s32.totalorder %s24, 1
      %p131 = por %p129, %p130
      %p133 = scmp.ne.s32.totalorder %s118, %s132
      %p134 = scmp.eq.s32.totalorder %s24, 0
      %p135 = por %p133, %p134
      %s137 = sadd.s32 %s136, 1
      %p140 = scmp.eq.s32.totalorder %s18, 1
      %p141 = scmp.ne.s32.totalorder %s136, %s138
      %p142 = scmp.eq.s32.totalorder %s18, 0
      %p143 = por %p141, %p142
      %p144 = scmp.ne.s32.totalorder %s136, %s138
      %p145 = scmp.eq.s32.totalorder %s23, 1
      %p146 = por %p144, %p145
      %p147 = scmp.ne.s32.totalorder %s138, %s139
      %p148 = scmp.eq.s32.totalorder %s23, 0
      %p149 = por %p147, %p148
      %p150 = scmp.ne.s32.totalorder %s138, %s139
      %p151 = scmp.eq.s32.totalorder %s24, 1
      %p152 = por %p150, %p151
      %p154 = scmp.ne.s32.totalorder %s139, %s153
      %p155 = scmp.eq.s32.totalorder %s24, 0
      %p156 = por %p154, %p155
      %s158 = sadd.s32 %s157, 1
      %p161 = scmp.eq.s32.totalorder %s18, 1
      %p162 = scmp.ne.s32.totalorder %s157, %s159
      %p163 = scmp.eq.s32.totalorder %s18, 0
      %p164 = por %p162, %p163
      %p165 = scmp.ne.s32.totalorder %s157, %s159
      %p166 = scmp.eq.s32.totalorder %s23, 1
      %p167 = por %p165, %p166
      %p168 = scmp.ne.s32.totalorder %s159, %s160
      %p169 = scmp.eq.s32.totalorder %s23, 0
      %p170 = por %p168, %p169
      %p171 = scmp.ne.s32.totalorder %s159, %s160
      %p172 = scmp.eq.s32.totalorder %s24, 1
      %p173 = por %p171, %p172
      %p175 = scmp.ne.s32.totalorder %s160, %s174
      %p176 = scmp.eq.s32.totalorder %s24, 0
      %p177 = por %p175, %p176
      %s178 = ssub.s32 %s18, %s25
      %p179 = scmp.eq.s32.totalorder %s178, 0
      %s181 = sadd.s32 %s180, 1
      %s182 = scalar_select %p179, %s180, %s181
      %p185 = pneg %p179
      %p186 = scmp.eq.s32.totalorder %s18, 1
      %p187 = por %p185, %p186
      %p188 = scmp.ne.s32.totalorder %s180, %s183
      %p189 = scmp.eq.s32.totalorder %s18, 0
      %p190 = por %p188, %p189
      %p191 = scmp.ne.s32.totalorder %s180, %s183
      %p192 = scmp.eq.s32.totalorder %s23, 1
      %p193 = por %p191, %p192
      %p194 = scmp.ne.s32.totalorder %s183, %s184
      %p195 = scmp.eq.s32.totalorder %s23, 0
      %p196 = por %p194, %p195
      %p197 = scmp.ne.s32.totalorder %s183, %s184
      %p198 = scmp.eq.s32.totalorder %s24, 1
      %p199 = por %p197, %p198
      %p201 = scmp.ne.s32.totalorder %s184, %s200
      %p202 = scmp.eq.s32.totalorder %s24, 0
      %p203 = por %p201, %p202
      %p204 = scmp.le.s32.totalorder 1, %s18
      %p205 = scmp.lt.s32.totalorder %s18, 3
      %p206 = pnand %p204, %p205
      %p207 = pneg %p206
      // Predicated region
      $region9: #{tpu_custom_call.1} parent=5 // pred_check
        _
      $region10: #{tpu_custom_call.1} parent=5 // pred_check_branch
        %209 = sbr.rel (%p206) target = $region12
      $region11: #{tpu_custom_call.1} parent=5 // pred_region
        %s210 = ssub.s32 %s18, 1
        // Predicated region
        $region13: #{tpu_custom_call.1} parent=11 // pred_check
          %p211 = pneg %p65
        $region14: #{tpu_custom_call.1} parent=11 // pred_check_branch
          %213 = sbr.rel (%p211) target = $region16
        $region15: #{tpu_custom_call.1} parent=11 // pred_region
          _
        $region16: #{tpu_custom_call.1} parent=11 // pred_fallthru
          _
        // Predicated region
        $region17: #{tpu_custom_call.1} parent=11 // pred_check
          %p214 = pneg %p86
        $region18: #{tpu_custom_call.1} parent=11 // pred_check_branch
          %216 = sbr.rel (%p214) target = $region20
        $region19: #{tpu_custom_call.1} parent=11 // pred_region
          _
        $region20: #{tpu_custom_call.1} parent=11 // pred_fallthru
          _
        // Predicated region
        $region21: #{tpu_custom_call.1} parent=11 // pred_check
          %p217 = pneg %p107
        $region22: #{tpu_custom_call.1} parent=11 // pred_check_branch
          %219 = sbr.rel (%p217) target = $region24
        $region23: #{tpu_custom_call.1} parent=11 // pred_region
          _
        $region24: #{tpu_custom_call.1} parent=11 // pred_fallthru
          _
        // Predicated region
        $region25: #{tpu_custom_call.1} parent=11 // pred_check
          %p220 = pneg %p128
        $region26: #{tpu_custom_call.1} parent=11 // pred_check_branch
          %222 = sbr.rel (%p220) target = $region28
        $region27: #{tpu_custom_call.1} parent=11 // pred_region
          _
        $region28: #{tpu_custom_call.1} parent=11 // pred_fallthru
          _
        // Predicated region
        $region29: #{tpu_custom_call.1} parent=11 // pred_check
          %p223 = pneg %p149
        $region30: #{tpu_custom_call.1} parent=11 // pred_check_branch
          %225 = sbr.rel (%p223) target = $region32
        $region31: #{tpu_custom_call.1} parent=11 // pred_region
          _
        $region32: #{tpu_custom_call.1} parent=11 // pred_fallthru
          _
        // Predicated region
        $region33: #{tpu_custom_call.1} parent=11 // pred_check
          %p226 = pneg %p170
        $region34: #{tpu_custom_call.1} parent=11 // pred_check_branch
          %228 = sbr.rel (%p226) target = $region36
        $region35: #{tpu_custom_call.1} parent=11 // pred_region
          _
        $region36: #{tpu_custom_call.1} parent=11 // pred_fallthru
          _
      $region12: #{tpu_custom_call.1} parent=5 // pred_fallthru
        _
      %p229 = scmp.lt.s32.totalorder %s18, 2
      // Predicated region
      $region37: #{tpu_custom_call.1} parent=5 // pred_check
        %p230 = pneg %p229
      $region38: #{tpu_custom_call.1} parent=5 // pred_check_branch
        %232 = sbr.rel (%p230) target = $region40
      $region39: #{tpu_custom_call.1} parent=5 // pred_region
        // Predicated region
        $region41: #{tpu_custom_call.1} parent=39 // pred_check
          %p233 = pneg %p38
        $region42: #{tpu_custom_call.1} parent=39 // pred_check_branch
          %235 = sbr.rel (%p233) target = $region44
        $region43: #{tpu_custom_call.1} parent=39 // pred_region
          %s236 = smul.u32 64, %s18
          %s237 = ssub.s32 125, %s236
          %p238 = scmp.lt.s32.totalorder %s237, 64
          %s239 = scalar_select %p238, %s237, 64
          %s240 = smul.u32 128, %s239
          %p241 = scmp.lt.s32.totalorder %s236, 124
          %s242 = scalar_select %p241, %s236, 124
          %s243 = smul.addr %s242, 8
          %s244 = scalar_lea.vmem %s0, %s243
          %s245 = smul.u32 64, %s18
          %s246 = ssub.s32 125, %s245
          %p247 = scmp.lt.s32.totalorder %s246, 64
          %s248 = scalar_select %p247, %s246, 64
          %s249 = smul.u32 128, %s248
        $region44: #{tpu_custom_call.1} parent=39 // pred_fallthru
          _
      $region40: #{tpu_custom_call.1} parent=5 // pred_fallthru
        _
      %p250 = scmp.le.s32.totalorder 1, %s18
      %p251 = scmp.lt.s32.totalorder %s18, 3
      %p252 = pnand %p250, %p251
      %p253 = pneg %p252
      // Predicated region
      $region45: #{tpu_custom_call.1} parent=5 // pred_check
        _
      $region46: #{tpu_custom_call.1} parent=5 // pred_check_branch
        %255 = sbr.rel (%p252) target = $region48
      $region47: #{tpu_custom_call.1} parent=5 // pred_region
        %s256 = ssub.s32 %s18, 1
        %s257 = smul.u32 64, %s23
        %s258 = ssub.s32 125, %s257
        %p259 = scmp.lt.s32.totalorder %s258, 64
        %s260 = scalar_select %p259, %s258, 64
        %s261 = smul.u32 128, %s260
        %p262 = scmp.lt.s32.totalorder %s257, 124
        %s263 = scalar_select %p262, %s257, 124
        %s264 = smul.addr %s263, 8
        %s265 = scalar_lea.vmem %s0, %s264
        %p266 = pneg %p44
        %p267 = pneg %p41
        %p268 = pneg %p65
        %p269 = pneg %p62
        %p270 = pneg %p86
        %p271 = pneg %p83
        %p272 = pneg %p107
        %p273 = pneg %p104
        %p274 = pneg %p128
        %p275 = pneg %p125
        %p276 = pneg %p149
        %p277 = pneg %p146
        %p278 = pneg %p170
        %p279 = pneg %p167
        %p280 = pneg %p196
        %p281 = pneg %p193
        %s282 = sand.u32 %s183, 1
        %s283 = scalar_lea.sflag [#allocation4], %s282
        %s284 = sand.u32 %s183, 1
        %s285 = smul.addr %s284, 4
        %s286 = scalar_lea.vmem [#allocation3], %s285
        %s287 = smul.u32 64, %s23
        %s288 = ssub.s32 125, %s287
        %p289 = scmp.lt.s32.totalorder %s288, 64
        %s290 = scalar_select %p289, %s288, 64
        %s291 = smul.u32 128, %s290
        %p292 = scmp.lt.s32.totalorder %s287, 124
        %s293 = scalar_select %p292, %s287, 124
        %s294 = smul.addr %s293, 8
        %s295 = scalar_lea.vmem %s0, %s294
        %s296 = smul.u32 64, %s23
        %s297 = ssub.s32 125, %s296
        %p298 = scmp.lt.s32.totalorder %s297, 64
        %s299 = scalar_select %p298, %s297, 64
        %s300 = smul.u32 128, %s299
        %s301 = smul.u32 4, %s23
        %v303 = vld [vmem:[%s295] sm:$0xff]
        %v304 = vld [vmem:[%s295 + $0x8] sm:$0xff]
        %v305 = vld [vmem:[%s295 + $0x10] sm:$0xff]
        %v306 = vld [vmem:[%s295 + $0x18] sm:$0xff]
        %v307 = vld [vmem:[%s295 + $0x20] sm:$0xff]
        %v308 = vld [vmem:[%s295 + $0x28] sm:$0xff]
        %v309 = vld [vmem:[%s295 + $0x30] sm:$0xff]
        %v310 = vld [vmem:[%s295 + $0x38] sm:$0xff]
        %v311 = vld [vmem:[%s295 + $0x40] sm:$0xff]
        %v312 = vld [vmem:[%s295 + $0x48] sm:$0xff]
        %v313 = vld [vmem:[%s295 + $0x50] sm:$0xff]
        %v314 = vld [vmem:[%s295 + $0x58] sm:$0xff]
        %v315 = vld [vmem:[%s295 + $0x60] sm:$0xff]
        %v316 = vld [vmem:[%s295 + $0x68] sm:$0xff]
        %v317 = vld [vmem:[%s295 + $0x70] sm:$0xff]
        %v318 = vld [vmem:[%s295 + $0x78] sm:$0xff]
        %v319 = vld [vmem:[%s295 + $0x80] sm:$0xff]
        %v320 = vld [vmem:[%s295 + $0x88] sm:$0xff]
        %v321 = vld [vmem:[%s295 + $0x90] sm:$0xff]
        %v322 = vld [vmem:[%s295 + $0x98] sm:$0xff]
        %v323 = vld [vmem:[%s295 + $0xa0] sm:$0xff]
        %v324 = vld [vmem:[%s295 + $0xa8] sm:$0xff]
        %v325 = vld [vmem:[%s295 + $0xb0] sm:$0xff]
        %v326 = vld [vmem:[%s295 + $0xb8] sm:$0xff]
        %v327 = vld [vmem:[%s295 + $0xc0] sm:$0xff]
        %v328 = vld [vmem:[%s295 + $0xc8] sm:$0xff]
        %v329 = vld [vmem:[%s295 + $0xd0] sm:$0xff]
        %v330 = vld [vmem:[%s295 + $0xd8] sm:$0xff]
        %v331 = vld [vmem:[%s295 + $0xe0] sm:$0xff]
        %v332 = vld [vmem:[%s295 + $0xe8] sm:$0xff]
        %v333 = vld [vmem:[%s295 + $0xf0] sm:$0xff]
        %v334 = vld [vmem:[%s295 + $0xf8] sm:$0xff]
        %v335 = vld [vmem:[%s295 + $0x100] sm:$0xff]
        %v336 = vld [vmem:[%s295 + $0x108] sm:$0xff]
        %v337 = vld [vmem:[%s295 + $0x110] sm:$0xff]
        %v338 = vld [vmem:[%s295 + $0x118] sm:$0xff]
        %v339 = vld [vmem:[%s295 + $0x120] sm:$0xff]
        %v340 = vld [vmem:[%s295 + $0x128] sm:$0xff]
        %v341 = vld [vmem:[%s295 + $0x130] sm:$0xff]
        %v342 = vld [vmem:[%s295 + $0x138] sm:$0xff]
        %v343 = vld [vmem:[%s295 + $0x140] sm:$0xff]
        %v344 = vld [vmem:[%s295 + $0x148] sm:$0xff]
        %v345 = vld [vmem:[%s295 + $0x150] sm:$0xff]
        %v346 = vld [vmem:[%s295 + $0x158] sm:$0xff]
        %v347 = vld [vmem:[%s295 + $0x160] sm:$0xff]
        %v348 = vld [vmem:[%s295 + $0x168] sm:$0xff]
        %v349 = vld [vmem:[%s295 + $0x170] sm:$0xff]
        %v350 = vld [vmem:[%s295 + $0x178] sm:$0xff]
        %v351 = vld [vmem:[%s295 + $0x180] sm:$0xff]
        %v352 = vld [vmem:[%s295 + $0x188] sm:$0xff]
        %v353 = vld [vmem:[%s295 + $0x190] sm:$0xff]
        %v354 = vld [vmem:[%s295 + $0x198] sm:$0xff]
        %v355 = vld [vmem:[%s295 + $0x1a0] sm:$0xff]
        %v356 = vld [vmem:[%s295 + $0x1a8] sm:$0xff]
        %v357 = vld [vmem:[%s295 + $0x1b0] sm:$0xff]
        %v358 = vld [vmem:[%s295 + $0x1b8] sm:$0xff]
        %v359 = vld [vmem:[%s295 + $0x1c0] sm:$0xff]
        %v360 = vld [vmem:[%s295 + $0x1c8] sm:$0xff]
        %v361 = vld [vmem:[%s295 + $0x1d0] sm:$0xff]
        %v362 = vld [vmem:[%s295 + $0x1d8] sm:$0xff]
        %v363 = vld [vmem:[%s295 + $0x1e0] sm:$0xff]
        %v364 = vld [vmem:[%s295 + $0x1e8] sm:$0xff]
        %v365 = vld [vmem:[%s295 + $0x1f0] sm:$0xff]
        %v366 = vld [vmem:[%s295 + $0x1f8] sm:$0xff]
        %v367 = vpack.c.bf16 %v304, %v303
        %v368 = vpack.c.bf16 %v306, %v305
        %v369 = vpack.c.bf16 %v308, %v307
        %v370 = vpack.c.bf16 %v310, %v309
        %v371 = vpack.c.bf16 %v312, %v311
        %v372 = vpack.c.bf16 %v314, %v313
        %v373 = vpack.c.bf16 %v316, %v315
        %v374 = vpack.c.bf16 %v318, %v317
        %v375 = vpack.c.bf16 %v320, %v319
        %v376 = vpack.c.bf16 %v322, %v321
        %v377 = vpack.c.bf16 %v324, %v323
        %v378 = vpack.c.bf16 %v326, %v325
        %v379 = vpack.c.bf16 %v328, %v327
        %v380 = vpack.c.bf16 %v330, %v329
        %v381 = vpack.c.bf16 %v332, %v331
        %v382 = vpack.c.bf16 %v334, %v333
        %v383 = vpack.c.bf16 %v336, %v335
        %v384 = vpack.c.bf16 %v338, %v337
        %v385 = vpack.c.bf16 %v340, %v339
        %v386 = vpack.c.bf16 %v342, %v341
        %v387 = vpack.c.bf16 %v344, %v343
        %v388 = vpack.c.bf16 %v346, %v345
        %v389 = vpack.c.bf16 %v348, %v347
        %v390 = vpack.c.bf16 %v350, %v349
        %v391 = vpack.c.bf16 %v352, %v351
        %v392 = vpack.c.bf16 %v354, %v353
        %v393 = vpack.c.bf16 %v356, %v355
        %v394 = vpack.c.bf16 %v358, %v357
        %v395 = vpack.c.bf16 %v360, %v359
        %v396 = vpack.c.bf16 %v362, %v361
        %v397 = vpack.c.bf16 %v364, %v363
        %v398 = vpack.c.bf16 %v366, %v365
        %v399 = vld [vmem:[%s1] sm:$0xff]
        %v400 = vld [vmem:[%s1 + $0x8] sm:$0x3]
        %v401 = vpack.c.bf16 %v400, %v399
        %v402 = vld [vmem:[%s2] sm:$0xff]
        %v403 = vld [vmem:[%s2 + $0x8] sm:$0x3]
        %405 = vset.pattern.permute.xlu0 0
        %406 = vperm.xlu0 %405, %v402
        %v407 = vpop.permute.xlu0 %406
        %410 = vset.pattern.permute.xlu0 0
        %411 = vperm.xlu0 %410, %v403
        %v412 = vpop.permute.xlu0 %411
        %vm414 = vcmask 105472
        %v416 = vsel %vm414, %v401, 0
        %v419 = vsel %vm414, %v367, 0
        %v422 = vsel %vm414, %v368, 0
        %v425 = vsel %vm414, %v369, 0
        %v428 = vsel %vm414, %v370, 0
        %v431 = vsel %vm414, %v371, 0
        %v434 = vsel %vm414, %v372, 0
        %v437 = vsel %vm414, %v373, 0
        %v440 = vsel %vm414, %v374, 0
        %v443 = vsel %vm414, %v375, 0
        %v446 = vsel %vm414, %v376, 0
        %v449 = vsel %vm414, %v377, 0
        %v452 = vsel %vm414, %v378, 0
        %v455 = vsel %vm414, %v379, 0
        %v458 = vsel %vm414, %v380, 0
        %v461 = vsel %vm414, %v381, 0
        %v464 = vsel %vm414, %v382, 0
        %v467 = vsel %vm414, %v383, 0
        %v470 = vsel %vm414, %v384, 0
        %v473 = vsel %vm414, %v385, 0
        %v476 = vsel %vm414, %v386, 0
        %v479 = vsel %vm414, %v387, 0
        %v482 = vsel %vm414, %v388, 0
        %v485 = vsel %vm414, %v389, 0
        %v488 = vsel %vm414, %v390, 0
        %v491 = vsel %vm414, %v391, 0
        %v494 = vsel %vm414, %v392, 0
        %v497 = vsel %vm414, %v393, 0
        %v500 = vsel %vm414, %v394, 0
        %v503 = vsel %vm414, %v395, 0
        %v506 = vsel %vm414, %v396, 0
        %v509 = vsel %vm414, %v397, 0
        %v512 = vsel %vm414, %v398, 0
        %514 = vmatprep.subr.bf16.mxu0 0
        %515 = vmatpush1.bf16.xpose.msra.mxu0 %v440
        %516 = vmatprep.subr.bf16.mxu0 0
        %517 = vmatpush1.bf16.xpose.msra.mxu0 %v437
        %518 = vmatprep.subr.bf16.mxu0 0
        %519 = vmatpush1.bf16.xpose.msra.mxu0 %v434
        %520 = vmatprep.subr.bf16.mxu0 0
        %521 = vmatpush1.bf16.xpose.msra.mxu0 %v431
        %522 = vmatprep.subr.bf16.mxu0 0
        %523 = vmatpush1.bf16.xpose.msra.mxu0 %v428
        %524 = vmatprep.subr.bf16.mxu0 0
        %525 = vmatpush1.bf16.xpose.msra.mxu0 %v425
        %526 = vmatprep.subr.bf16.mxu0 0
        %527 = vmatpush1.bf16.xpose.msra.mxu0 %v422
        %528 = vmatprep.subr.bf16.mxu0 0
        %529 = vmatpush1.bf16.xpose.msra.mxu0 %v419
        %530 = vmatprep.subr.bf16.mxu0 0
        %531 = vmatpush2.bf16.xpose.msra.mxu0 %v464
        %532 = vmatprep.subr.bf16.mxu0 0
        %533 = vmatpush2.bf16.xpose.msra.mxu0 %v461
        %534 = vmatprep.subr.bf16.mxu0 0
        %535 = vmatpush2.bf16.xpose.msra.mxu0 %v458
        %536 = vmatprep.subr.bf16.mxu0 0
        %537 = vmatpush2.bf16.xpose.msra.mxu0 %v455
        %538 = vmatprep.subr.bf16.mxu0 0
        %539 = vmatpush2.bf16.xpose.msra.mxu0 %v452
        %540 = vmatprep.subr.bf16.mxu0 0
        %541 = vmatpush2.bf16.xpose.msra.mxu0 %v449
        %542 = vmatprep.subr.bf16.mxu0 0
        %543 = vmatpush2.bf16.xpose.msra.mxu0 %v446
        %544 = vmatprep.subr.bf16.mxu0 0
        %545 = vmatpush2.bf16.xpose.msra.mxu0 %v443
        %546 = vmatprep.mubr.bf16.mxu0 0
        %547 = vmatmul.mubr.bf16.gmra.mxu0 %v416
        %v548 = vpop.f32.mrf.mxu0
        %v549 = vadd.f32 %v407, %v548
        %v550 = vpop.f32.mrf.mxu0
        %v551 = vadd.f32 %v407, %v550
        %v552 = vpop.f32.mrf.mxu0
        %v553 = vadd.f32 %v412, %v552
        %v554 = vpop.f32.mrf.mxu0
        %v555 = vadd.f32 %v412, %v554
        %556 = vdwg.mxu0
        %557 = vmatprep.subr.bf16.mxu0 0
        %558 = vmatpush1.bf16.xpose.msra.mxu0 %v488
        %559 = vmatprep.subr.bf16.mxu0 0
        %560 = vmatpush1.bf16.xpose.msra.mxu0 %v485
        %561 = vmatprep.subr.bf16.mxu0 0
        %562 = vmatpush1.bf16.xpose.msra.mxu0 %v482
        %563 = vmatprep.subr.bf16.mxu0 0
        %564 = vmatpush1.bf16.xpose.msra.mxu0 %v479
        %565 = vmatprep.subr.bf16.mxu0 0
        %566 = vmatpush1.bf16.xpose.msra.mxu0 %v476
        %567 = vmatprep.subr.bf16.mxu0 0
        %568 = vmatpush1.bf16.xpose.msra.mxu0 %v473
        %569 = vmatprep.subr.bf16.mxu0 0
        %570 = vmatpush1.bf16.xpose.msra.mxu0 %v470
        %571 = vmatprep.subr.bf16.mxu0 0
        %572 = vmatpush1.bf16.xpose.msra.mxu0 %v467
        %573 = vmatprep.subr.bf16.mxu0 0
        %574 = vmatpush2.bf16.xpose.msra.mxu0 %v512
        %575 = vmatprep.subr.bf16.mxu0 0
        %576 = vmatpush2.bf16.xpose.msra.mxu0 %v509
        %577 = vmatprep.subr.bf16.mxu0 0
        %578 = vmatpush2.bf16.xpose.msra.mxu0 %v506
        %579 = vmatprep.subr.bf16.mxu0 0
        %580 = vmatpush2.bf16.xpose.msra.mxu0 %v503
        %581 = vmatprep.subr.bf16.mxu0 0
        %582 = vmatpush2.bf16.xpose.msra.mxu0 %v500
        %583 = vmatprep.subr.bf16.mxu0 0
        %584 = vmatpush2.bf16.xpose.msra.mxu0 %v497
        %585 = vmatprep.subr.bf16.mxu0 0
        %586 = vmatpush2.bf16.xpose.msra.mxu0 %v494
        %587 = vmatprep.subr.bf16.mxu0 0
        %588 = vmatpush2.bf16.xpose.msra.mxu0 %v491
        %589 = vmatprep.mubr.bf16.mxu0 0
        %590 = vmatmul.mubr.bf16.gmra.mxu0 %v416
        %v591 = vpop.f32.mrf.mxu0
        %v592 = vadd.f32 %v407, %v591
        %v593 = vpop.f32.mrf.mxu0
        %v594 = vadd.f32 %v407, %v593
        %v595 = vpop.f32.mrf.mxu0
        %v596 = vadd.f32 %v412, %v595
        %v597 = vpop.f32.mrf.mxu0
        %v598 = vadd.f32 %v412, %v597
        %599 = vdwg.mxu0
        %v600 = vmax.f32 %v549, 0.0
        %v601 = vmax.f32 %v551, 0.0
        %v602 = vmax.f32 %v592, 0.0
        %v603 = vmax.f32 %v594, 0.0
        %v604 = vmax.f32 %v553, 0.0
        %v605 = vmax.f32 %v555, 0.0
        %v606 = vmax.f32 %v596, 0.0
        %v607 = vmax.f32 %v598, 0.0
        %v608 = vld [vmem:[%s3] sm:$0xff]
        %v609 = vld [vmem:[%s3 + $0x8] sm:$0x7f]
        %v610 = vpack.c.bf16 %v609, %v608
        %v611 = vpack.c.bf16 %v604, %v600
        %v612 = vpack.c.bf16 %v605, %v601
        %v613 = vpack.c.bf16 %v606, %v602
        %v614 = vpack.c.bf16 %v607, %v603
        %v615 = vld [vmem:[%s4] sm:$0xff]
        %v616 = vld [vmem:[%s4 + $0x8] sm:$0x7f]
        %618 = vset.pattern.permute.xlu0 0
        %619 = vperm.xlu0 %618, %v615
        %v620 = vpop.permute.xlu0 %619
        %623 = vset.pattern.permute.xlu0 0
        %624 = vperm.xlu0 %623, %v616
        %v625 = vpop.permute.xlu0 %624
        %vm627 = vcmask 80896
        %v629 = vsel %vm627, %v610, 0
        %vm631 = vcmask 1044480
        %v633 = vsel %vm631, %v611, 0
        %v636 = vsel %vm631, %v612, 0
        %v639 = vsel %vm631, %v613, 0
        %v642 = vsel %vm631, %v614, 0
        %644 = vmatprep.subr.bf16.mxu0 0
        %645 = vmatpush1.bf16.msra.mxu0 0
        %646 = vmatprep.subr.bf16.mxu0 0
        %647 = vmatpush1.bf16.msra.mxu0 0
        %648 = vmatprep.subr.bf16.mxu0 0
        %649 = vmatpush1.bf16.msra.mxu0 0
        %650 = vmatprep.subr.bf16.mxu0 0
        %651 = vmatpush1.bf16.msra.mxu0 0
        %652 = vmatprep.subr.bf16.mxu0 0
        %653 = vmatpush1.bf16.msra.mxu0 0
        %654 = vmatprep.subr.bf16.mxu0 0
        %655 = vmatpush1.bf16.msra.mxu0 0
        %656 = vmatprep.subr.bf16.mxu0 0
        %657 = vmatpush1.bf16.msra.mxu0 0
        %658 = vmatprep.subr.bf16.mxu0 %v636
        %659 = vmatpush1.bf16.msra.mxu0 %v633
        %660 = vmatprep.subr.bf16.mxu0 0
        %661 = vmatpush2.bf16.msra.mxu0 0
        %662 = vmatprep.subr.bf16.mxu0 0
        %663 = vmatpush2.bf16.msra.mxu0 0
        %664 = vmatprep.subr.bf16.mxu0 0
        %665 = vmatpush2.bf16.msra.mxu0 0
        %666 = vmatprep.subr.bf16.mxu0 0
        %667 = vmatpush2.bf16.msra.mxu0 0
        %668 = vmatprep.subr.bf16.mxu0 0
        %669 = vmatpush2.bf16.msra.mxu0 0
        %670 = vmatprep.subr.bf16.mxu0 0
        %671 = vmatpush2.bf16.msra.mxu0 0
        %672 = vmatprep.subr.bf16.mxu0 0
        %673 = vmatpush2.bf16.msra.mxu0 0
        %674 = vmatprep.subr.bf16.mxu0 0
        %675 = vmatpush2.bf16.msra.mxu0 0
        %676 = vmatprep.mubr.bf16.mxu0 0
        %677 = vmatmul.mubr.bf16.gmra.mxu0 %v629
        %v678 = vpop.f32.mrf.mxu0
        %v679 = vadd.f32 %v620, %v678
        %v680 = vpop.f32.mrf.mxu0
        %v681 = vadd.f32 %v620, %v680
        %v682 = vpop.f32.mrf.mxu0
        %v683 = vadd.f32 %v625, %v682
        %v684 = vpop.f32.mrf.mxu0
        %v685 = vadd.f32 %v625, %v684
        %686 = vdwg.mxu0
        %687 = vmatprep.subr.bf16.mxu0 0
        %688 = vmatpush1.bf16.msra.mxu0 0
        %689 = vmatprep.subr.bf16.mxu0 0
        %690 = vmatpush1.bf16.msra.mxu0 0
        %691 = vmatprep.subr.bf16.mxu0 0
        %692 = vmatpush1.bf16.msra.mxu0 0
        %693 = vmatprep.subr.bf16.mxu0 0
        %694 = vmatpush1.bf16.msra.mxu0 0
        %695 = vmatprep.subr.bf16.mxu0 0
        %696 = vmatpush1.bf16.msra.mxu0 0
        %697 = vmatprep.subr.bf16.mxu0 0
        %698 = vmatpush1.bf16.msra.mxu0 0
        %699 = vmatprep.subr.bf16.mxu0 0
        %700 = vmatpush1.bf16.msra.mxu0 0
        %701 = vmatprep.subr.bf16.mxu0 %v642
        %702 = vmatpush1.bf16.msra.mxu0 %v639
        %703 = vmatprep.subr.bf16.mxu0 0
        %704 = vmatpush2.bf16.msra.mxu0 0
        %705 = vmatprep.subr.bf16.mxu0 0
        %706 = vmatpush2.bf16.msra.mxu0 0
        %707 = vmatprep.subr.bf16.mxu0 0
        %708 = vmatpush2.bf16.msra.mxu0 0
        %709 = vmatprep.subr.bf16.mxu0 0
        %710 = vmatpush2.bf16.msra.mxu0 0
        %711 = vmatprep.subr.bf16.mxu0 0
        %712 = vmatpush2.bf16.msra.mxu0 0
        %713 = vmatprep.subr.bf16.mxu0 0
        %714 = vmatpush2.bf16.msra.mxu0 0
        %715 = vmatprep.subr.bf16.mxu0 0
        %716 = vmatpush2.bf16.msra.mxu0 0
        %717 = vmatprep.subr.bf16.mxu0 0
        %718 = vmatpush2.bf16.msra.mxu0 0
        %719 = vmatprep.mubr.bf16.mxu0 0
        %720 = vmatmul.mubr.bf16.gmra.mxu0 %v629
        %v721 = vpop.f32.mrf.mxu0
        %v722 = vadd.f32 %v620, %v721
        %v723 = vpop.f32.mrf.mxu0
        %v724 = vadd.f32 %v620, %v723
        %v725 = vpop.f32.mrf.mxu0
        %v726 = vadd.f32 %v625, %v725
        %v727 = vpop.f32.mrf.mxu0
        %v728 = vadd.f32 %v625, %v727
        %729 = vdwg.mxu0
        %v730 = vmax.f32 %v679, 0.0
        %v731 = vmax.f32 %v681, 0.0
        %v732 = vmax.f32 %v722, 0.0
        %v733 = vmax.f32 %v724, 0.0
        %v734 = vmax.f32 %v683, 0.0
        %v735 = vmax.f32 %v685, 0.0
        %v736 = vmax.f32 %v726, 0.0
        %v737 = vmax.f32 %v728, 0.0
        %v738 = vld [vmem:[%s5] sm:$0x1]
        %v739 = vpack.c.bf16 %v738, %v738
        %v740 = vpack.c.bf16 %v734, %v730
        %v741 = vpack.c.bf16 %v735, %v731
        %v742 = vpack.c.bf16 %v736, %v732
        %v743 = vpack.c.bf16 %v737, %v733
        %v744 = vld [vmem:[#allocation2] sm:$0x1]
        %746 = vset.pattern.permute.xlu0 0
        %747 = vperm.xlu0 %746, %v744
        %v748 = vpop.permute.xlu0 %747
        %v750 = vlaneseq
        %v751 = vshrl.u32 %v750, 7
        %v752 = vsub.s32 0, %v751
        %v753 = vrot.slane %v748, %v752
        %vm754 = vcmask 121856
        %v756 = vsel %vm754, %v739, 0
        %vm758 = vcmask 1046528
        %vm759 = vcmask 1047552
        %v760 = vsel %vm758, 4294967295, 65535
        %v761 = vsel %vm759, %v760, 0
        %v763 = vand.u32 %v740, %v761
        %v766 = vand.u32 %v741, %v761
        %v769 = vand.u32 %v742, %v761
        %v772 = vand.u32 %v743, %v761
        %774 = vmatprep.subr.bf16.mxu0 0
        %775 = vmatpush1.bf16.msra.mxu0 0
        %776 = vmatprep.subr.bf16.mxu0 0
        %777 = vmatpush1.bf16.msra.mxu0 0
        %778 = vmatprep.subr.bf16.mxu0 0
        %779 = vmatpush1.bf16.msra.mxu0 0
        %780 = vmatprep.subr.bf16.mxu0 0
        %781 = vmatpush1.bf16.msra.mxu0 0
        %782 = vmatprep.subr.bf16.mxu0 0
        %783 = vmatpush1.bf16.msra.mxu0 0
        %784 = vmatprep.subr.bf16.mxu0 0
        %785 = vmatpush1.bf16.msra.mxu0 0
        %786 = vmatprep.subr.bf16.mxu0 0
        %787 = vmatpush1.bf16.msra.mxu0 0
        %788 = vmatprep.subr.bf16.mxu0 %v766
        %789 = vmatpush1.bf16.msra.mxu0 %v763
        %790 = vmatprep.subr.bf16.mxu0 0
        %791 = vmatpush2.bf16.msra.mxu0 0
        %792 = vmatprep.subr.bf16.mxu0 0
        %793 = vmatpush2.bf16.msra.mxu0 0
        %794 = vmatprep.subr.bf16.mxu0 0
        %795 = vmatpush2.bf16.msra.mxu0 0
        %796 = vmatprep.subr.bf16.mxu0 0
        %797 = vmatpush2.bf16.msra.mxu0 0
        %798 = vmatprep.subr.bf16.mxu0 0
        %799 = vmatpush2.bf16.msra.mxu0 0
        %800 = vmatprep.subr.bf16.mxu0 0
        %801 = vmatpush2.bf16.msra.mxu0 0
        %802 = vmatprep.subr.bf16.mxu0 0
        %803 = vmatpush2.bf16.msra.mxu0 0
        %804 = vmatprep.subr.bf16.mxu0 0
        %805 = vmatpush2.bf16.msra.mxu0 0
        %806 = vmatprep.mubr.bf16.mxu0 0
        %807 = vmatmul.mubr.bf16.gmra.mxu0 %v756
        %v808 = vpop.f32.mrf.mxu0
        %v809 = vadd.f32 %v753, %v808
        %v810 = vpop.f32.mrf.mxu0
        %v811 = vadd.f32 %v753, %v810
        %v812 = vpop.f32.mrf.mxu0
        %v813 = vpop.f32.mrf.mxu0
        %814 = vdwg.mxu0
        %815 = vmatprep.subr.bf16.mxu0 0
        %816 = vmatpush1.bf16.msra.mxu0 0
        %817 = vmatprep.subr.bf16.mxu0 0
        %818 = vmatpush1.bf16.msra.mxu0 0
        %819 = vmatprep.subr.bf16.mxu0 0
        %820 = vmatpush1.bf16.msra.mxu0 0
        %821 = vmatprep.subr.bf16.mxu0 0
        %822 = vmatpush1.bf16.msra.mxu0 0
        %823 = vmatprep.subr.bf16.mxu0 0
        %824 = vmatpush1.bf16.msra.mxu0 0
        %825 = vmatprep.subr.bf16.mxu0 0
        %826 = vmatpush1.bf16.msra.mxu0 0
        %827 = vmatprep.subr.bf16.mxu0 0
        %828 = vmatpush1.bf16.msra.mxu0 0
        %829 = vmatprep.subr.bf16.mxu0 %v772
        %830 = vmatpush1.bf16.msra.mxu0 %v769
        %831 = vmatprep.subr.bf16.mxu0 0
        %832 = vmatpush2.bf16.msra.mxu0 0
        %833 = vmatprep.subr.bf16.mxu0 0
        %834 = vmatpush2.bf16.msra.mxu0 0
        %835 = vmatprep.subr.bf16.mxu0 0
        %836 = vmatpush2.bf16.msra.mxu0 0
        %837 = vmatprep.subr.bf16.mxu0 0
        %838 = vmatpush2.bf16.msra.mxu0 0
        %839 = vmatprep.subr.bf16.mxu0 0
        %840 = vmatpush2.bf16.msra.mxu0 0
        %841 = vmatprep.subr.bf16.mxu0 0
        %842 = vmatpush2.bf16.msra.mxu0 0
        %843 = vmatprep.subr.bf16.mxu0 0
        %844 = vmatpush2.bf16.msra.mxu0 0
        %845 = vmatprep.subr.bf16.mxu0 0
        %846 = vmatpush2.bf16.msra.mxu0 0
        %847 = vmatprep.mubr.bf16.mxu0 0
        %848 = vmatmul.mubr.bf16.gmra.mxu0 %v756
        %v849 = vpop.f32.mrf.mxu0
        %v850 = vadd.f32 %v753, %v849
        %v851 = vpop.f32.mrf.mxu0
        %v852 = vadd.f32 %v753, %v851
        %v853 = vpop.f32.mrf.mxu0
        %v854 = vpop.f32.mrf.mxu0
        %855 = vdwg.mxu0
        %v860 = vcombine.low %v809, %v811
        %v861 = vcombine.low %v850, %v852
        %v863 = vunpack.c.l.s4 1966171168
        %v864 = vunpack.c.0.s8 %v863
        %v865 = vlaneseq
        %v866 = vshrl.u32 %v865, 7
        %v867 = vsub.s32 %v864, %v866
        %v868 = vrot.slane %v860, %v867
        %v870 = vunpack.c.l.s4 1966171168
        %v871 = vunpack.c.0.s8 %v870
        %v872 = vlaneseq
        %v873 = vshrl.u32 %v872, 7
        %v874 = vsub.s32 %v871, %v873
        %v875 = vrot.slane %v861, %v874
        %v876 = vcombine.low %v868, %v875
        %v878 = vunpack.c.l.s4 1966171168
        %v879 = vunpack.c.0.s8 %v878
        %v880 = vlaneseq
        %v881 = vshrl.u32 %v880, 7
        %v882 = vsub.s32 %v879, %v881
        %v883 = vrot.slane %v876, %v882
        %v885 = vlaneseq
        %vm886 = vcmp.ge.s32.totalorder %v885, 0
        %vm887 = vcmp.lt.s32.totalorder %v885, 512
        %vm888 = vmand %vm886, %vm887
        %889 = vst.msk [vmem:[%s286] sm:$0xf] %vm888, %v883
        %s890 = sand.u32 %s183, 1
        %s891 = scalar_lea.sflag [#allocation4], %s890
        %s892 = sand.u32 %s183, 1
        %s893 = smul.addr %s892, 4
        %s894 = scalar_lea.vmem [#allocation3], %s893
        // Predicated region
        $region49: #{tpu_custom_call.1} parent=47 // pred_check
          %p895 = pneg %p193
        $region50: #{tpu_custom_call.1} parent=47 // pred_check_branch
          %897 = sbr.rel (%p895) target = $region52
        $region51: #{tpu_custom_call.1} parent=47 // pred_region
          %s898 = smul.u32 4, %s23
          %s900 = ssub.s32 64, 64
          %901 = vsyncadd %s891, %s900
          %s902 = smul.addr %s898, 16
          %s903 = scalar_lea.hbm %s7, %s902
          %s905 = sshll.u32 %s894, 4
          %s906 = int_to_ptr.vmem [resolvable:$true] %s905
          %908 = dma.vmem_to_hbm [thread:$0]  %s906, 64, %s903, %s891
        $region52: #{tpu_custom_call.1} parent=47 // pred_fallthru
          _
      $region48: #{tpu_custom_call.1} parent=5 // pred_fallthru
        _
      %p909 = scmp.le.s32.totalorder 2, %s18
      // Predicated region
      $region53: #{tpu_custom_call.1} parent=5 // pred_check
        %p910 = pneg %p909
      $region54: #{tpu_custom_call.1} parent=5 // pred_check_branch
        %912 = sbr.rel (%p910) target = $region56
      $region55: #{tpu_custom_call.1} parent=5 // pred_region
        %s913 = ssub.s32 %s18, 2
        // Predicated region
        $region57: #{tpu_custom_call.1} parent=55 // pred_check
          %p914 = pneg %p199
        $region58: #{tpu_custom_call.1} parent=55 // pred_check_branch
          %916 = sbr.rel (%p914) target = $region60
        $region59: #{tpu_custom_call.1} parent=55 // pred_region
          %s917 = sand.u32 %s184, 1
          %s918 = scalar_lea.sflag [#allocation4], %s917
          %s919 = sand.u32 %s184, 1
          %s920 = smul.addr %s919, 4
          %s921 = scalar_lea.vmem [#allocation3], %s920
          %922 = dma.done %s918, 64
        $region60: #{tpu_custom_call.1} parent=55 // pred_fallthru
          _
      $region56: #{tpu_custom_call.1} parent=5 // pred_fallthru
        _
    $region6: #{tpu_custom_call.1} parent=1 // loop_footer
      %s22 = sadd.s32 1, %s18
    $region7: #{tpu_custom_call.1} parent=1 // loop_footer_branch
      %17 = sbr.rel target = $region3
    $region8: #{tpu_custom_call.1} parent=1 // loop_exit
      _
    %923 = vsyncpa [#allocation4], 1
    %s924 = scalar_lea.sflag [#allocation4], 1
    %925 = vsyncpa %s924, 1

</llo_original>
